<compile_context>
chip_gen: v7x
topology: tpu7x:2x2x1
jax: 0.10.0
libtpu: 0.0.40
codegen_flags: <defaults>
</compile_context>

<pallas_src>
import functools

import jax
import jax.numpy as jnp
from jax import lax
from jax.experimental import pallas as pl
from jax.experimental.pallas import tpu as pltpu


def _cdiv(a, b):
    return -(-a // b)


def _round_up(x, m):
    return ((x + m - 1) // m) * m


def _softplus(y):
    # torch.nn.functional.softplus semantics (threshold=20).  The min() guards
    # exp overflow in the untaken branch; exp/log1p ride the EUP slot.
    safe = jnp.minimum(y, 20.0)
    return jnp.where(y > 20.0, y, jnp.log1p(jnp.exp(safe)))


def _encoder_kernel_dense(x_ref, w_ref, b_ref, o_ref):
    # Lane-dense epilogue path (t_tile is a multiple of 128).
    #   x_ref: (K, T_TILE)  native layout: K on sublanes, time on lanes
    #   w_ref: (K, N), b_ref: (N, 1)  -- resident in VMEM across the grid
    #   o_ref: (T_TILE, N)
    yT = lax.dot_general(
        w_ref[...], x_ref[...],
        dimension_numbers=(((0,), (0,)), ((), ())),   # contract K on both sides
        preferred_element_type=jnp.float32,
    )                                                 # (N, T_TILE): fully lane-dense
    yT = yT + b_ref[...]                              # lane-broadcast bias add (dense)
    act = _softplus(yT)                               # dense VPU/EUP work
    o_ref[...] = act.T.astype(o_ref.dtype)            # XLU transpose -> row-major store


def _encoder_kernel_small(x_ref, w_ref, b_ref, o_ref):
    # Fallback for tiny T (< 128): one exact block, row-major compute.
    #   x_ref: (K, T), w_ref: (K, N), b_ref: (1, N), o_ref: (T, N)
    y = lax.dot_general(
        x_ref[...], w_ref[...],
        dimension_numbers=(((0,), (0,)), ((), ())),
        preferred_element_type=jnp.float32,
    )                                                 # (T, N)
    y = y + b_ref[...]
    o_ref[...] = _softplus(y).astype(o_ref.dtype)


@functools.partial(jax.jit, static_argnames=("max_tile_t", "out_dtype"))
def worm_sensory_encoder(x, weight, bias, *, max_tile_t=8192, out_dtype=jnp.float32):
    """x: (B, n_input, T) f32; weight: (n_output, n_input); bias: (n_output,).

    Returns (B, T, n_output), matching the PyTorch module's forward.
    max_tile_t: timesteps of output per grid step (multiple of 128 used when
    T >= 128).  8192 amortizes per-step overhead on all generations while using
    only a few MiB of VMEM; sweepable up to ~64K on v6e / ~32K on v7x.
    """
    B, K, T = x.shape
    N = weight.shape[0]
    w_kn = weight.T                       # (K, N): contraction dim leading on both sides

    if T < 128:
        # Tiny sequence: one exact block per batch element (block dims equal the
        # full array dims, so no (8,128) constraint, no padding, no slicing).
        kernel = _encoder_kernel_small
        t_tile = T
        n_t_steps = 1
        b_arg = bias.reshape(1, N)
        b_spec = pl.BlockSpec((1, N), lambda b, t: (0, 0))
    else:
        # Lane-dense path: 128-aligned time tiles; ragged T is handled by
        # Pallas's partial boundary block (no jnp.pad / output slice passes).
        kernel = _encoder_kernel_dense
        n_t_steps = _cdiv(T, max_tile_t)
        if B == 1 and n_t_steps == 1 and T >= 256:
            n_t_steps = 2                 # keep >= 2 grid steps so both v7x TCs work
        t_tile = _round_up(_cdiv(T, n_t_steps), 128)
        n_t_steps = _cdiv(T, t_tile)
        b_arg = bias.reshape(N, 1)
        b_spec = pl.BlockSpec((N, 1), lambda b, t: (0, 0))

    grid = (B, n_t_steps)

    out_itemsize = jnp.dtype(out_dtype).itemsize
    cost = pl.CostEstimate(
        flops=2 * B * T * K * N,
        transcendentals=2 * B * T * N,    # exp + log1p per output element
        bytes_accessed=4 * (B * K * T + K * N + N) + out_itemsize * B * T * N,
    )

    return pl.pallas_call(
        kernel,
        out_shape=jax.ShapeDtypeStruct((B, T, N), out_dtype),
        grid=grid,
        in_specs=[
            # x tile in native (K, t_tile) layout, streamed & double-buffered.
            pl.BlockSpec((None, K, t_tile), lambda b, t: (b, 0, t)),
            # weight & bias: constant index_map -> resident in VMEM across the grid.
            pl.BlockSpec((K, N), lambda b, t: (0, 0)),
            b_spec,
        ],
        out_specs=pl.BlockSpec((None, t_tile, N), lambda b, t: (b, t, 0)),
        compiler_params=pltpu.CompilerParams(
            dimension_semantics=("parallel", "parallel"),   # megacore sharding on v7x
            vmem_limit_bytes=32 * 1024 * 1024,
        ),
        cost_estimate=cost,
    )(x, w_kn, b_arg)


def init_params(key, n_input, n_output):
    """Deterministic PyTorch-style Linear init: U(-1/sqrt(fan_in), 1/sqrt(fan_in))."""
    kw, kb = jax.random.split(key)
    bound = 1.0 / jnp.sqrt(jnp.float32(n_input))
    weight = jax.random.uniform(kw, (n_output, n_input), jnp.float32, -bound, bound)
    bias = jax.random.uniform(kb, (n_output,), jnp.float32, -bound, bound)
    return weight, bias


if __name__ == "__main__":
    key = jax.random.PRNGKey(0)
    k_x, k_p, k_x2 = jax.random.split(key, 3)

    B, n_input, T, n_output = 2, 16, 8, 32
    weight, bias = init_params(k_p, n_input, n_output)

    def reference(x):
        # Same math as the PyTorch forward, in plain JAX.
        return jax.nn.softplus(jnp.einsum("bit,oi->bto", x, weight) + bias)

    # 1) tiny-T path (single exact block, row-major kernel)
    x_small = jax.random.normal(k_x, (B, n_input, T), jnp.float32)
    out_small = jax.block_until_ready(worm_sensory_encoder(x_small, weight, bias))
    assert out_small.shape == (B, T, n_output)
    assert jnp.allclose(out_small, reference(x_small), atol=1e-5, rtol=1e-5)

    # 2) lane-dense path (128-aligned time tiles, transposed-MXU epilogue)
    T2 = 2048
    x_big = jax.random.normal(k_x2, (B, n_input, T2), jnp.float32)
    out_big = jax.block_until_ready(worm_sensory_encoder(x_big, weight, bias))
    assert out_big.shape == (B, T2, n_output)
    assert jnp.allclose(out_big, reference(x_big), atol=1e-5, rtol=1e-5)

    print("KERNEL_OK")
</pallas_src>

<mosaic_0001>
module attributes {stable_mosaic.version = 11 : i64} {
  func.func @_encoder_kernel_small(%arg0: i32, %arg1: i32, %arg2: memref<1x16x8xf32, #tpu.memory_space<vmem>>, %arg3: memref<16x32xf32, #tpu.memory_space<vmem>>, %arg4: memref<1x32xf32, #tpu.memory_space<vmem>>, %arg5: memref<1x8x32xf32, #tpu.memory_space<vmem>>) attributes {dimension_semantics = [#tpu.dimension_semantics<parallel>, #tpu.dimension_semantics<parallel>], iteration_bounds = array<i64: 2, 1>, scalar_prefetch = 0 : i64, scratch_operands = 0 : i64, tpu.core_type = #tpu.core_type<tc>, window_params = [{transform_indices = @transform_0, window_bounds = array<i64: 1, 16, 8>}, {pipeline_mode = #tpu.pipeline_mode<synchronous>, transform_indices = @transform_1, window_bounds = array<i64: 16, 32>}, {pipeline_mode = #tpu.pipeline_mode<synchronous>, transform_indices = @transform_2, window_bounds = array<i64: 1, 32>}, {transform_indices = @transform_3, window_bounds = array<i64: 1, 8, 32>}]} {
    %c0 = arith.constant 0 : index
    %c0_0 = arith.constant 0 : index
    %c0_1 = arith.constant 0 : index
    %0 = vector.load %arg2[%c0, %c0_0, %c0_1] : memref<1x16x8xf32, #tpu.memory_space<vmem>>, vector<1x16x8xf32>
    %1 = vector.shape_cast %0 : vector<1x16x8xf32> to vector<16x8xf32>
    %c0_2 = arith.constant 0 : index
    %c0_3 = arith.constant 0 : index
    %2 = vector.load %arg3[%c0_2, %c0_3] : memref<16x32xf32, #tpu.memory_space<vmem>>, vector<16x32xf32>
    %cst = arith.constant dense<0.000000e+00> : vector<8x32xf32>
    %3 = tpu.matmul %1, %2, %cst {dimension_numbers = #tpu.dot_dimension_numbers<[0], [0], [1], [1], [0, 1, 1, 1], [], []>} : vector<16x8xf32>, vector<16x32xf32>, vector<8x32xf32> -> vector<8x32xf32>
    %c0_4 = arith.constant 0 : index
    %c0_5 = arith.constant 0 : index
    %4 = vector.load %arg4[%c0_4, %c0_5] : memref<1x32xf32, #tpu.memory_space<vmem>>, vector<1x32xf32>
    %5 = vector.broadcast %4 : vector<1x32xf32> to vector<8x32xf32>
    %6 = arith.addf %3, %5 : vector<8x32xf32>
    %cst_6 = arith.constant 2.000000e+01 : f32
    %7 = vector.broadcast %cst_6 : f32 to vector<8x32xf32>
    %8 = arith.minimumf %6, %7 : vector<8x32xf32>
    %cst_7 = arith.constant 2.000000e+01 : f32
    %9 = vector.broadcast %cst_7 : f32 to vector<8x32xf32>
    %10 = arith.cmpf ogt, %6, %9 : vector<8x32xf32>
    %11 = math.exp %8 : vector<8x32xf32>
    %12 = math.log1p %11 : vector<8x32xf32>
    %13 = arith.select %10, %6, %12 : vector<8x32xi1>, vector<8x32xf32>
    %c0_8 = arith.constant 0 : index
    %c0_9 = arith.constant 0 : index
    %c0_10 = arith.constant 0 : index
    %14 = vector.load %arg5[%c0_8, %c0_9, %c0_10] : memref<1x8x32xf32, #tpu.memory_space<vmem>>, vector<1x8x32xf32>
    %15 = vector.shape_cast %14 : vector<1x8x32xf32> to vector<8x32xf32>
    %16 = vector.shape_cast %13 : vector<8x32xf32> to vector<1x8x32xf32>
    tpu.vector_store %arg5[%c0_8, %c0_9, %c0_10], %16 {strides = array<i32>} : memref<1x8x32xf32, #tpu.memory_space<vmem>>, vector<1x8x32xf32>,
    return
  }
  func.func @transform_0(%arg0: i32, %arg1: i32) -> (i32, i32, i32) {
    %c0_i32 = arith.constant 0 : i32
    %c0_i32_0 = arith.constant 0 : i32
    return %arg0, %c0_i32, %arg1 : i32, i32, i32
  }
  func.func @transform_1(%arg0: i32, %arg1: i32) -> (i32, i32) {
    %c0_i32 = arith.constant 0 : i32
    %c0_i32_0 = arith.constant 0 : i32
    %c0_i32_1 = arith.constant 0 : i32
    return %c0_i32, %c0_i32_0 : i32, i32
  }
  func.func @transform_2(%arg0: i32, %arg1: i32) -> (i32, i32) {
    %c0_i32 = arith.constant 0 : i32
    %c0_i32_0 = arith.constant 0 : i32
    %c0_i32_1 = arith.constant 0 : i32
    return %c0_i32, %c0_i32_0 : i32, i32
  }
  func.func @transform_3(%arg0: i32, %arg1: i32) -> (i32, i32, i32) {
    %c0_i32 = arith.constant 0 : i32
    %c0_i32_0 = arith.constant 0 : i32
    return %arg0, %arg1, %c0_i32 : i32, i32, i32
  }
}

</mosaic_0001>

<llo_original>
// kernel: worm_sensory_encoder.1
$region0: #{worm_sensory_encoder.1}
  #allocation0 [shape = 'u32[]', space=smem, size = 0x4, offset = 0x4, fixed_abs, tag = 'smem constant byte address 0x4 - core index']
  #allocation1 [shape = 'u32[144,128]{1,0:T(1,128)}', space=vmem, size = 0x12000, scoped, tag = 'internal scratch']
  %s0 = inlined_call_operand.vmem [shape: f32[2,16,8], index: 0, kind: input, shape index: {}]
  %s1 = inlined_call_operand.vmem [shape: f32[16,32], index: 1, kind: input, shape index: {}]
  %s2 = inlined_call_operand.vmem [shape: f32[1,32], index: 2, kind: input, shape index: {}]
  %s3 = inlined_call_operand.hbm [shape: f32[2,8,32], index: 3, kind: output, shape index: {}]
  %s4 = sld [smem:[#allocation0]]
  $region45: #{worm_sensory_encoder.1} parent=0
    _
  %s6 = ssub.s32 1, %s4
  %s7 = scalar_select 0, %s6, %s4
  $region1: #{worm_sensory_encoder.1} parent=0
    #allocation2 [shape = 'u8[8192]{0}', space=vmem, size = 0x2000, scoped, tag = 'output window, operand 0']
    #allocation3 [shape = 's32[2]{0}', space=sflag, size = 0x8, scoped, tag = 'scoped memory for worm_sensory_encoder.1']
    %8 = vsyncpa [#allocation3], 0
    %s9 = scalar_lea.sflag [#allocation3], 1
    %10 = vsyncpa %s9, 0
    loop: start=0, step=1, limit=4
    $region2: #{worm_sensory_encoder.1} parent=1 // loop_pre_header
      _
    $region3: #{worm_sensory_encoder.1} parent=1 // loop_header
      %s12 = sphi 0, %s16
      %p13 = scmp.ge.s32.totalorder %s12, 4
      %s19 = sphi 0, %s31
      %s20 = sphi 0, %s27
      %s21 = sphi 0, %s19
      %s22 = sphi 0, %s20
      %s23 = sphi 0, %s21
      %s24 = sphi 0, %s22
      %s36 = sphi 0, %s38
      %s39 = sphi 0, %s36
      %s40 = sphi 0, %s39
      %s56 = sphi 0, %s40
      %s60 = sphi 0, %s60
      %s62 = sphi 0, %s60
      %s63 = sphi 0, %s62
      %s77 = sphi 0, %s63
      %s81 = sphi 0, %s81
      %s83 = sphi 0, %s81
      %s84 = sphi 0, %s83
      %s98 = sphi 0, %s84
      %s106 = sphi 0, %s108
      %s109 = sphi 0, %s106
      %s110 = sphi 0, %s109
      %s126 = sphi 0, %s110
    $region4: #{worm_sensory_encoder.1} parent=1 // loop_header_branch
      %15 = sbr.rel (%p13) target = $region8
    $region5: #{worm_sensory_encoder.1} parent=1 // loop_body
      %s17 = ssub.s32 %s12, 1
      %s18 = ssub.s32 %s12, 2
      %s25 = sadd.s32 1, %s20
      %p26 = scmp.ge.s32.totalorder %s25, 1
      %s27 = scalar_select %p26, 0, %s25
      %s28 = sadd.s32 1, %s19
      %s29 = scalar_select %p26, %s28, %s19
      %p30 = scmp.ge.s32.totalorder %s29, 2
      %s31 = scalar_select %p30, 0, %s29
      %s32 = ssub.s32 %s19, %s31
      %s33 = ssub.s32 %s20, %s27
      %s34 = sor.u32 %s32, %s33
      %p35 = scmp.eq.s32.totalorder %s34, 0
      %s37 = sadd.s32 %s36, 1
      %s38 = scalar_select %p35, %s36, %s37
      %p41 = pneg %p35
      %p42 = scmp.eq.s32.totalorder %s12, 1
      %p43 = por %p41, %p42
      %p44 = scmp.ne.s32.totalorder %s36, %s39
      %p45 = scmp.eq.s32.totalorder %s12, 0
      %p46 = por %p44, %p45
      %p47 = scmp.ne.s32.totalorder %s36, %s39
      %p48 = scmp.eq.s32.totalorder %s17, 1
      %p49 = por %p47, %p48
      %p50 = scmp.ne.s32.totalorder %s39, %s40
      %p51 = scmp.eq.s32.totalorder %s17, 0
      %p52 = por %p50, %p51
      %p53 = scmp.ne.s32.totalorder %s39, %s40
      %p54 = scmp.eq.s32.totalorder %s18, 1
      %p55 = por %p53, %p54
      %p57 = scmp.ne.s32.totalorder %s40, %s56
      %p58 = scmp.eq.s32.totalorder %s18, 0
      %p59 = por %p57, %p58
      %s61 = sadd.s32 %s60, 1
      %p64 = scmp.eq.s32.totalorder %s12, 1
      %p65 = scmp.ne.s32.totalorder %s60, %s62
      %p66 = scmp.eq.s32.totalorder %s12, 0
      %p67 = por %p65, %p66
      %p68 = scmp.ne.s32.totalorder %s60, %s62
      %p69 = scmp.eq.s32.totalorder %s17, 1
      %p70 = por %p68, %p69
      %p71 = scmp.ne.s32.totalorder %s62, %s63
      %p72 = scmp.eq.s32.totalorder %s17, 0
      %p73 = por %p71, %p72
      %p74 = scmp.ne.s32.totalorder %s62, %s63
      %p75 = scmp.eq.s32.totalorder %s18, 1
      %p76 = por %p74, %p75
      %p78 = scmp.ne.s32.totalorder %s63, %s77
      %p79 = scmp.eq.s32.totalorder %s18, 0
      %p80 = por %p78, %p79
      %s82 = sadd.s32 %s81, 1
      %p85 = scmp.eq.s32.totalorder %s12, 1
      %p86 = scmp.ne.s32.totalorder %s81, %s83
      %p87 = scmp.eq.s32.totalorder %s12, 0
      %p88 = por %p86, %p87
      %p89 = scmp.ne.s32.totalorder %s81, %s83
      %p90 = scmp.eq.s32.totalorder %s17, 1
      %p91 = por %p89, %p90
      %p92 = scmp.ne.s32.totalorder %s83, %s84
      %p93 = scmp.eq.s32.totalorder %s17, 0
      %p94 = por %p92, %p93
      %p95 = scmp.ne.s32.totalorder %s83, %s84
      %p96 = scmp.eq.s32.totalorder %s18, 1
      %p97 = por %p95, %p96
      %p99 = scmp.ne.s32.totalorder %s84, %s98
      %p100 = scmp.eq.s32.totalorder %s18, 0
      %p101 = por %p99, %p100
      %s102 = ssub.s32 %s19, %s31
      %s103 = ssub.s32 %s20, %s27
      %s104 = sor.u32 %s102, %s103
      %p105 = scmp.eq.s32.totalorder %s104, 0
      %s107 = sadd.s32 %s106, 1
      %s108 = scalar_select %p105, %s106, %s107
      %p111 = pneg %p105
      %p112 = scmp.eq.s32.totalorder %s12, 1
      %p113 = por %p111, %p112
      %p114 = scmp.ne.s32.totalorder %s106, %s109
      %p115 = scmp.eq.s32.totalorder %s12, 0
      %p116 = por %p114, %p115
      %p117 = scmp.ne.s32.totalorder %s106, %s109
      %p118 = scmp.eq.s32.totalorder %s17, 1
      %p119 = por %p117, %p118
      %p120 = scmp.ne.s32.totalorder %s109, %s110
      %p121 = scmp.eq.s32.totalorder %s17, 0
      %p122 = por %p120, %p121
      %p123 = scmp.ne.s32.totalorder %s109, %s110
      %p124 = scmp.eq.s32.totalorder %s18, 1
      %p125 = por %p123, %p124
      %p127 = scmp.ne.s32.totalorder %s110, %s126
      %p128 = scmp.eq.s32.totalorder %s18, 0
      %p129 = por %p127, %p128
      %p130 = scmp.le.s32.totalorder 1, %s12
      %p131 = scmp.lt.s32.totalorder %s12, 3
      %p132 = pnand %p130, %p131
      %p133 = pneg %p132
      // Predicated region
      $region9: #{worm_sensory_encoder.1} parent=5 // pred_check
        _
      $region10: #{worm_sensory_encoder.1} parent=5 // pred_check_branch
        %135 = sbr.rel (%p132) target = $region12
      $region11: #{worm_sensory_encoder.1} parent=5 // pred_region
        %s136 = ssub.s32 %s12, 1
        // Predicated region
        $region13: #{worm_sensory_encoder.1} parent=11 // pred_check
          %p137 = pneg %p73
        $region14: #{worm_sensory_encoder.1} parent=11 // pred_check_branch
          %139 = sbr.rel (%p137) target = $region16
        $region15: #{worm_sensory_encoder.1} parent=11 // pred_region
          _
        $region16: #{worm_sensory_encoder.1} parent=11 // pred_fallthru
          _
        // Predicated region
        $region17: #{worm_sensory_encoder.1} parent=11 // pred_check
          %p140 = pneg %p94
        $region18: #{worm_sensory_encoder.1} parent=11 // pred_check_branch
          %142 = sbr.rel (%p140) target = $region20
        $region19: #{worm_sensory_encoder.1} parent=11 // pred_region
          _
        $region20: #{worm_sensory_encoder.1} parent=11 // pred_fallthru
          _
      $region12: #{worm_sensory_encoder.1} parent=5 // pred_fallthru
        _
      %p143 = scmp.lt.s32.totalorder %s12, 2
      // Predicated region
      $region21: #{worm_sensory_encoder.1} parent=5 // pred_check
        %p144 = pneg %p143
      $region22: #{worm_sensory_encoder.1} parent=5 // pred_check_branch
        %146 = sbr.rel (%p144) target = $region24
      $region23: #{worm_sensory_encoder.1} parent=5 // pred_region
        // Predicated region
        $region25: #{worm_sensory_encoder.1} parent=23 // pred_check
          %p147 = pneg %p46
        $region26: #{worm_sensory_encoder.1} parent=23 // pred_check_branch
          %149 = sbr.rel (%p147) target = $region28
        $region27: #{worm_sensory_encoder.1} parent=23 // pred_region
          %p150 = scmp.lt.s32.totalorder %s19, 1
          %s151 = scalar_select %p150, %s19, 1
          %p152 = scmp.lt.s32.totalorder %s20, 0
          %s153 = scalar_select %p152, %s20, 0
          %s154 = smul.addr %s151, 2
          %s155 = sadd.s32 %s153, %s154
          %s156 = smul.addr %s155, 8
          %s157 = scalar_lea.vmem %s0, %s156
        $region28: #{worm_sensory_encoder.1} parent=23 // pred_fallthru
          _
      $region24: #{worm_sensory_encoder.1} parent=5 // pred_fallthru
        _
      %p158 = scmp.le.s32.totalorder 1, %s12
      %p159 = scmp.lt.s32.totalorder %s12, 3
      %p160 = pnand %p158, %p159
      %p161 = pneg %p160
      // Predicated region
      $region29: #{worm_sensory_encoder.1} parent=5 // pred_check
        _
      $region30: #{worm_sensory_encoder.1} parent=5 // pred_check_branch
        %163 = sbr.rel (%p160) target = $region32
      $region31: #{worm_sensory_encoder.1} parent=5 // pred_region
        %s164 = ssub.s32 %s12, 1
        %p165 = scmp.lt.s32.totalorder %s21, 1
        %s166 = scalar_select %p165, %s21, 1
        %p167 = scmp.lt.s32.totalorder %s22, 0
        %s168 = scalar_select %p167, %s22, 0
        %s169 = smul.addr %s166, 2
        %s170 = sadd.s32 %s168, %s169
        %s171 = smul.addr %s170, 8
        %s172 = scalar_lea.vmem %s0, %s171
        %p173 = pneg %p52
        %p174 = pneg %p49
        %p175 = pneg %p73
        %p176 = pneg %p70
        %p177 = pneg %p94
        %p178 = pneg %p91
        %p179 = pneg %p122
        %p180 = pneg %p119
        %s181 = sand.u32 %s109, 1
        %s182 = scalar_lea.sflag [#allocation3], %s181
        %s183 = sand.u32 %s109, 1
        %s184 = smul.addr %s183, 8
        %s185 = scalar_lea.vmem [#allocation2], %s184
        %p186 = scmp.lt.s32.totalorder %s21, 1
        %s187 = scalar_select %p186, %s21, 1
        %p188 = scmp.lt.s32.totalorder %s22, 0
        %s189 = scalar_select %p188, %s22, 0
        %s190 = smul.addr %s187, 2
        %s191 = sadd.s32 %s189, %s190
        %s192 = smul.addr %s191, 8
        %s193 = scalar_lea.vmem %s0, %s192
        %v194 = vld [vmem:[%s193] sm:$0xff]
        %v195 = vld [vmem:[%s193 + $0x8] sm:$0xff]
        %v196 = vld [vmem:[%s1] sm:$0xff]
        %v197 = vld [vmem:[%s1 + $0x8] sm:$0xff]
        %v198 = vld [vmem:[%s2] sm:$0x1]
        %v200 = vlaneseq
        %v201 = vshrl.u32 %v200, 7
        %v202 = vsub.s32 0, %v201
        %v203 = vrot.slane %v198, %v202
        %205 = vxpose.xlu0.b32.start [1/16] %v194, 128
        %206 = vxpose.xlu0.b32.cont [2/16] %v195, 128
        %207 = vxpose.xlu0.b32.cont [3/16] 0.0, 128
        %208 = vxpose.xlu0.b32.cont [4/16] 0.0, 128
        %209 = vxpose.xlu0.b32.cont [5/16] 0.0, 128
        %210 = vxpose.xlu0.b32.cont [6/16] 0.0, 128
        %211 = vxpose.xlu0.b32.cont [7/16] 0.0, 128
        %212 = vxpose.xlu0.b32.cont [8/16] 0.0, 128
        %213 = vxpose.xlu0.b32.cont [9/16] 0.0, 128
        %214 = vxpose.xlu0.b32.cont [10/16] 0.0, 128
        %215 = vxpose.xlu0.b32.cont [11/16] 0.0, 128
        %216 = vxpose.xlu0.b32.cont [12/16] 0.0, 128
        %217 = vxpose.xlu0.b32.cont [13/16] 0.0, 128
        %218 = vxpose.xlu0.b32.cont [14/16] 0.0, 128
        %219 = vxpose.xlu0.b32.cont [15/16] 0.0, 128
        %220 = vxpose.xlu0.b32.end [16/16] 0.0, 128
        %v221 = vpop.trf.xlu0
        %v222 = vpop.trf.xlu0
        %v223 = vpop.trf.xlu0
        %v224 = vpop.trf.xlu0
        %v225 = vpop.trf.xlu0
        %v226 = vpop.trf.xlu0
        %v227 = vpop.trf.xlu0
        %v228 = vpop.trf.xlu0
        %v229 = vpop.trf.xlu0
        %v230 = vpop.trf.xlu0
        %v231 = vpop.trf.xlu0
        %v232 = vpop.trf.xlu0
        %v233 = vpop.trf.xlu0
        %v234 = vpop.trf.xlu0
        %v235 = vpop.trf.xlu0
        %v236 = vpop.trf.xlu0
        %vm237 = vcmask 130048
        %v239 = vsel %vm237, %v221, 0
        %241 = vmatprep.subr.mxu0 0.0
        %242 = vmatpush1.msra.mxu0 %v196
        %243 = vmatprep.subr.mxu0 0.0
        %244 = vmatpush1.msra.mxu0 %v197
        %245 = vmatprep.subr.mxu0 0.0
        %246 = vmatpush1.msra.mxu0 0.0
        %247 = vmatprep.subr.mxu0 0.0
        %248 = vmatpush1.msra.mxu0 0.0
        %249 = vmatprep.subr.mxu0 0.0
        %250 = vmatpush1.msra.mxu0 0.0
        %251 = vmatprep.subr.mxu0 0.0
        %252 = vmatpush1.msra.mxu0 0.0
        %253 = vmatprep.subr.mxu0 0.0
        %254 = vmatpush1.msra.mxu0 0.0
        %255 = vmatprep.subr.mxu0 0.0
        %256 = vmatpush1.msra.mxu0 0.0
        %257 = vmatprep.subr.mxu0 0.0
        %258 = vmatpush1.msra.mxu0 0.0
        %259 = vmatprep.subr.mxu0 0.0
        %260 = vmatpush1.msra.mxu0 0.0
        %261 = vmatprep.subr.mxu0 0.0
        %262 = vmatpush1.msra.mxu0 0.0
        %263 = vmatprep.subr.mxu0 0.0
        %264 = vmatpush1.msra.mxu0 0.0
        %265 = vmatprep.subr.mxu0 0.0
        %266 = vmatpush1.msra.mxu0 0.0
        %267 = vmatprep.subr.mxu0 0.0
        %268 = vmatpush1.msra.mxu0 0.0
        %269 = vmatprep.subr.mxu0 0.0
        %270 = vmatpush1.msra.mxu0 0.0
        %271 = vmatprep.subr.mxu0 0.0
        %272 = vmatpush1.msra.mxu0 0.0
        %273 = vmatprep.subr.mxu0 0.0
        %274 = vmatpush1.msra.mxu0 0.0
        %275 = vmatprep.subr.mxu0 0.0
        %276 = vmatpush1.msra.mxu0 0.0
        %277 = vmatprep.subr.mxu0 0.0
        %278 = vmatpush1.msra.mxu0 0.0
        %279 = vmatprep.subr.mxu0 0.0
        %280 = vmatpush1.msra.mxu0 0.0
        %281 = vmatprep.subr.mxu0 0.0
        %282 = vmatpush1.msra.mxu0 0.0
        %283 = vmatprep.subr.mxu0 0.0
        %284 = vmatpush1.msra.mxu0 0.0
        %285 = vmatprep.subr.mxu0 0.0
        %286 = vmatpush1.msra.mxu0 0.0
        %287 = vmatprep.subr.mxu0 0.0
        %288 = vmatpush1.msra.mxu0 0.0
        %289 = vmatprep.subr.mxu0 0.0
        %290 = vmatpush1.msra.mxu0 0.0
        %291 = vmatprep.subr.mxu0 0.0
        %292 = vmatpush1.msra.mxu0 0.0
        %293 = vmatprep.subr.mxu0 0.0
        %294 = vmatpush1.msra.mxu0 0.0
        %295 = vmatprep.subr.mxu0 0.0
        %296 = vmatpush1.msra.mxu0 0.0
        %297 = vmatprep.subr.mxu0 0.0
        %298 = vmatpush1.msra.mxu0 0.0
        %299 = vmatprep.subr.mxu0 0.0
        %300 = vmatpush1.msra.mxu0 0.0
        %301 = vmatprep.subr.mxu0 0.0
        %302 = vmatpush1.msra.mxu0 0.0
        %303 = vmatprep.subr.mxu0 0.0
        %304 = vmatpush1.msra.mxu0 0.0
        %305 = vmatprep.mubr.f32.mxu0 0.0
        %306 = vmatmul.mubr.f32.gmra.mrb[0].mxu0 %v239
        %v307 = vpop.f32.mrb[0].mxu0
        %v308 = vadd.f32 %v203, %v307
        %v309 = vpop.f32.mrb[0].mxu0
        %310 = vdwg.mxu0
        %v311 = vmin.f32 %v308, 20.0
        %vm312 = vcmp.gt.f32.partialorder %v308, 20.0
        %v313 = vmul.f32 %v311, 1.442695
        %v314 = vpow.pop %v313
        %v315 = vadd.f32 %v314, 1.0
        %v316 = vlog2.pop %v315
        %v317 = vmul.f32 %v316, 0.6931472
        %v318 = vmul.f32 -0.5, %v314
        %v319 = vadd.f32 %v318, 1.0
        %v320 = vmul.f32 %v319, %v314
        %v321 = vand.u32 2147483647, %v314
        %vm322 = vcmp.lt.f32.partialorder %v321, 0.0004427343
        %v323 = vsel %vm322, %v320, %v317
        %v324 = vsel %vm312, %v308, %v323
        %vm325 = vcmask 261120
        %326 = vst.msk [vmem:[%s185] sm:$0xff] %vm325, %v324
        %s327 = sand.u32 %s109, 1
        %s328 = scalar_lea.sflag [#allocation3], %s327
        %s329 = sand.u32 %s109, 1
        %s330 = smul.addr %s329, 8
        %s331 = scalar_lea.vmem [#allocation2], %s330
        // Predicated region
        $region33: #{worm_sensory_encoder.1} parent=31 // pred_check
          %p332 = pneg %p119
        $region34: #{worm_sensory_encoder.1} parent=31 // pred_check_branch
          %334 = sbr.rel (%p332) target = $region36
        $region35: #{worm_sensory_encoder.1} parent=31 // pred_region
          %s336 = ssub.s32 128, 128
          %337 = vsyncadd %s328, %s336
          %s338 = sadd.s32 %s22, %s21
          %s339 = smul.addr %s338, 128
          %s340 = scalar_lea.hbm %s3, %s339
          %s342 = sshll.u32 %s331, 4
          %s343 = int_to_ptr.vmem [resolvable:$true] %s342
          %345 = dma.vmem_to_hbm [thread:$0]  %s343, 128, %s340, %s328
        $region36: #{worm_sensory_encoder.1} parent=31 // pred_fallthru
          _
      $region32: #{worm_sensory_encoder.1} parent=5 // pred_fallthru
        _
      %p346 = scmp.le.s32.totalorder 2, %s12
      // Predicated region
      $region37: #{worm_sensory_encoder.1} parent=5 // pred_check
        %p347 = pneg %p346
      $region38: #{worm_sensory_encoder.1} parent=5 // pred_check_branch
        %349 = sbr.rel (%p347) target = $region40
      $region39: #{worm_sensory_encoder.1} parent=5 // pred_region
        %s350 = ssub.s32 %s12, 2
        // Predicated region
        $region41: #{worm_sensory_encoder.1} parent=39 // pred_check
          %p351 = pneg %p125
        $region42: #{worm_sensory_encoder.1} parent=39 // pred_check_branch
          %353 = sbr.rel (%p351) target = $region44
        $region43: #{worm_sensory_encoder.1} parent=39 // pred_region
          %s354 = sand.u32 %s110, 1
          %s355 = scalar_lea.sflag [#allocation3], %s354
          %s356 = sand.u32 %s110, 1
          %s357 = smul.addr %s356, 8
          %s358 = scalar_lea.vmem [#allocation2], %s357
          %359 = dma.done %s355, 128
        $region44: #{worm_sensory_encoder.1} parent=39 // pred_fallthru
          _
      $region40: #{worm_sensory_encoder.1} parent=5 // pred_fallthru
        _
    $region6: #{worm_sensory_encoder.1} parent=1 // loop_footer
      %s16 = sadd.s32 1, %s12
    $region7: #{worm_sensory_encoder.1} parent=1 // loop_footer_branch
      %11 = sbr.rel target = $region3
    $region8: #{worm_sensory_encoder.1} parent=1 // loop_exit
      _
    %360 = vsyncpa [#allocation3], 1
    %s361 = scalar_lea.sflag [#allocation3], 1
    %362 = vsyncpa %s361, 1

</llo_original>
